<compile_context>
chip_gen: v6e
topology: v6e:2x2x1
jax: 0.10.0
libtpu: 0.0.40
codegen_flags: <defaults>
</compile_context>

<pallas_src>
import functools

import jax
import jax.numpy as jnp
from jax.experimental import pallas as pl
from jax.experimental.pallas import tpu as pltpu


def _ohce_kernel(x_ref, t_ref, partial_ref, *, tile_n, n_rows):
    """Per-tile partial of sum(-log_softmax(x, axis=1) * t)."""
    i = pl.program_id(0)

    x = x_ref[...].astype(jnp.float32)            # (tile_n, C)
    t = t_ref[...].astype(jnp.float32)            # (tile_n, C)

    # Numerically stable log-sum-exp over the class (lane) axis.
    m = jnp.max(x, axis=1, keepdims=True)                          # (tile_n, 1)
    lse = jnp.log(jnp.sum(jnp.exp(x - m), axis=1, keepdims=True))  # (tile_n, 1)

    # sum_c(-logp * t) == (m + lse) * sum_c(t) - sum_c(t * x); logp never built.
    t_sum = jnp.sum(t, axis=1, keepdims=True)                      # (tile_n, 1)
    tx_sum = jnp.sum(t * x, axis=1, keepdims=True)                 # (tile_n, 1)
    row_loss = (m + lse) * t_sum - tx_sum                          # (tile_n, 1)

    # Mask out padded rows of the last (remainder) tile.
    row_ids = jax.lax.broadcasted_iota(jnp.int32, (tile_n, 1), 0) + i * tile_n
    row_loss = jnp.where(row_ids < n_rows, row_loss, 0.0)

    partial_ref[0, 0] = jnp.sum(row_loss)


def _pick_tile_n(n_rows, n_cols, itemsize):
    """Largest batch tile that keeps 2 inputs x 2 pipeline buffers in budget."""
    # Sublane multiple for the input dtype: 8 (f32), 16 (bf16), 32 (int8/fp8).
    mult = max(8, 32 // int(itemsize))
    budget = 16 * 1024 * 1024                       # bytes for streamed inputs
    per_row = 2 * 2 * n_cols * int(itemsize)        # 2 inputs x 2 buffers
    tile = max(budget // per_row, mult)
    tile = min(tile, 1024)                          # knee of pipeline-overhead curve
    tile = min(tile, ((n_rows + mult - 1) // mult) * mult)
    tile = max((tile // mult) * mult, mult)
    return int(tile)


def one_hot_cross_entropy(inputs, targets, *, tile_n=None):
    """inputs, targets: (N, C) float arrays. Returns scalar float32 loss."""
    N, C = inputs.shape
    assert targets.shape == (N, C)

    in_itemsize = jnp.dtype(inputs.dtype).itemsize
    tgt_itemsize = jnp.dtype(targets.dtype).itemsize
    if tile_n is None:
        tile_n = _pick_tile_n(N, C, max(in_itemsize, tgt_itemsize))
    num_tiles = pl.cdiv(N, tile_n)

    # TODO(synk): for vocab-scale C that cannot fit a (tile_n, C) block in VMEM
    # (esp. v7x's 64 MiB), add an inner class-tile grid axis with an online
    # logsumexp / sum(t*x) / sum(t) accumulator (flash-softmax style).

    kernel = functools.partial(_ohce_kernel, tile_n=tile_n, n_rows=N)

    cost = pl.CostEstimate(
        flops=5 * N * C,
        transcendentals=N * C,
        bytes_accessed=N * C * (in_itemsize + tgt_itemsize) + num_tiles * 4,
    )

    partials = pl.pallas_call(
        kernel,
        out_shape=jax.ShapeDtypeStruct((num_tiles, 1), jnp.float32),
        grid_spec=pltpu.PrefetchScalarGridSpec(
            num_scalar_prefetch=0,
            grid=(num_tiles,),
            in_specs=[
                pl.BlockSpec((tile_n, C), lambda i: (i, 0)),
                pl.BlockSpec((tile_n, C), lambda i: (i, 0)),
            ],
            # One scalar partial per grid step -> disjoint output blocks,
            # so the grid axis can be "parallel" (megacore on v7x).
            out_specs=pl.BlockSpec((1, 1), lambda i: (i, 0),
                                   memory_space=pltpu.SMEM),
        ),
        compiler_params=pltpu.CompilerParams(
            dimension_semantics=("parallel",),
            vmem_limit_bytes=32 * 1024 * 1024,
        ),
        cost_estimate=cost,
    )(inputs, targets)

    return jnp.sum(partials) / jnp.float32(N)


def _reference(inputs, targets):
    logp = jax.nn.log_softmax(inputs.astype(jnp.float32), axis=1)
    return jnp.sum(-logp * targets.astype(jnp.float32)) / inputs.shape[0]


if __name__ == "__main__":
    key = jax.random.PRNGKey(0)
    k1, k2 = jax.random.split(key)

    N, C = 16, 128  # small shapes; C maps to the 128-wide lane axis
    logits = jax.random.normal(k1, (N, C), dtype=jnp.float32)

    # Soft one-hot style targets (e.g. mixup labels): rows sum to 1.
    labels = jax.random.randint(k2, (N,), 0, C)
    targets = jax.nn.one_hot(labels, C, dtype=jnp.float32)
    lam = 0.7
    targets = lam * targets + (1.0 - lam) * jnp.roll(targets, 1, axis=0)

    loss = one_hot_cross_entropy(logits, targets)
    loss = jax.block_until_ready(loss)

    ref = _reference(logits, targets)
    assert jnp.allclose(loss, ref, rtol=1e-5, atol=1e-5), (loss, ref)

    # Also exercise the remainder-masking path (N not a multiple of tile_n).
    N2 = 13
    logits2 = jax.random.normal(k1, (N2, C), dtype=jnp.float32)
    targets2 = jax.nn.one_hot(jax.random.randint(k2, (N2,), 0, C), C,
                              dtype=jnp.float32)
    loss2 = jax.block_until_ready(
        one_hot_cross_entropy(logits2, targets2, tile_n=8))
    ref2 = _reference(logits2, targets2)
    assert jnp.allclose(loss2, ref2, rtol=1e-5, atol=1e-5), (loss2, ref2)

    print("KERNEL_OK")
</pallas_src>

<mosaic_0001>
module attributes {stable_mosaic.version = 11 : i64} {
  func.func @_ohce_kernel(%arg0: i32, %arg1: memref<16x128xf32, #tpu.memory_space<vmem>>, %arg2: memref<16x128xf32, #tpu.memory_space<vmem>>, %arg3: memref<1x1xf32, #tpu.memory_space<smem>>) attributes {dimension_semantics = [#tpu.dimension_semantics<parallel>], iteration_bounds = array<i64: 1>, scalar_prefetch = 0 : i64, scratch_operands = 0 : i64, tpu.core_type = #tpu.core_type<tc>, window_params = [{transform_indices = @transform_0, window_bounds = array<i64: 16, 128>}, {transform_indices = @transform_1, window_bounds = array<i64: 16, 128>}, {transform_indices = @transform_2, window_bounds = array<i64: 1, 1>}]} {
    %c0 = arith.constant 0 : index
    %c0_0 = arith.constant 0 : index
    %0 = vector.load %arg1[%c0, %c0_0] : memref<16x128xf32, #tpu.memory_space<vmem>>, vector<16x128xf32>
    %c0_1 = arith.constant 0 : index
    %c0_2 = arith.constant 0 : index
    %1 = vector.load %arg2[%c0_1, %c0_2] : memref<16x128xf32, #tpu.memory_space<vmem>>, vector<16x128xf32>
    %cst = arith.constant dense<0xFF800000> : vector<16xf32>
    %2 = vector.multi_reduction <maximumf>, %0, %cst [1] : vector<16x128xf32> to vector<16xf32>
    %3 = vector.shape_cast %2 : vector<16xf32> to vector<16x1xf32>
    %4 = vector.broadcast %3 : vector<16x1xf32> to vector<16x128xf32>
    %5 = arith.subf %0, %4 : vector<16x128xf32>
    %6 = math.exp %5 : vector<16x128xf32>
    %cst_3 = arith.constant dense<0.000000e+00> : vector<16xf32>
    %7 = vector.multi_reduction <add>, %6, %cst_3 [1] : vector<16x128xf32> to vector<16xf32>
    %8 = vector.shape_cast %7 : vector<16xf32> to vector<16x1xf32>
    %9 = math.log %8 : vector<16x1xf32>
    %cst_4 = arith.constant dense<0.000000e+00> : vector<16xf32>
    %10 = vector.multi_reduction <add>, %1, %cst_4 [1] : vector<16x128xf32> to vector<16xf32>
    %11 = vector.shape_cast %10 : vector<16xf32> to vector<16x1xf32>
    %12 = arith.mulf %1, %0 : vector<16x128xf32>
    %cst_5 = arith.constant dense<0.000000e+00> : vector<16xf32>
    %13 = vector.multi_reduction <add>, %12, %cst_5 [1] : vector<16x128xf32> to vector<16xf32>
    %14 = vector.shape_cast %13 : vector<16xf32> to vector<16x1xf32>
    %15 = arith.addf %3, %9 : vector<16x1xf32>
    %16 = arith.mulf %15, %11 : vector<16x1xf32>
    %17 = arith.subf %16, %14 : vector<16x1xf32>
    %18 = tpu.iota {dimensions = array<i32: 0>} : vector<16x1xi32>
    %c16_i32 = arith.constant 16 : i32
    %19 = arith.muli %arg0, %c16_i32 : i32
    %20 = vector.broadcast %19 : i32 to vector<16x1xi32>
    %21 = arith.addi %18, %20 : vector<16x1xi32>
    %c16_i32_6 = arith.constant 16 : i32
    %22 = vector.broadcast %c16_i32_6 : i32 to vector<16x1xi32>
    %23 = arith.cmpi slt, %21, %22 : vector<16x1xi32>
    %cst_7 = arith.constant 0.000000e+00 : f32
    %24 = vector.broadcast %cst_7 : f32 to vector<16x1xf32>
    %25 = arith.select %23, %17, %24 : vector<16x1xi1>, vector<16x1xf32>
    %26 = vector.shape_cast %25 : vector<16x1xf32> to vector<1x16x1xf32>
    %cst_8 = arith.constant dense<0.000000e+00> : vector<1xf32>
    %27 = vector.multi_reduction <add>, %26, %cst_8 [1, 2] : vector<1x16x1xf32> to vector<1xf32>
    %28 = vector.shape_cast %27 : vector<1xf32> to vector<1x1x1xf32>
    %29 = vector.extract %28[0, 0, 0] : f32 from vector<1x1x1xf32>
    %c0_9 = arith.constant 0 : index
    %c0_10 = arith.constant 0 : index
    %30 = memref.load %arg3[%c0_9, %c0_10] : memref<1x1xf32, #tpu.memory_space<smem>>
    memref.store %29, %arg3[%c0_9, %c0_10] : memref<1x1xf32, #tpu.memory_space<smem>>
    return
  }
  func.func @transform_0(%arg0: i32) -> (i32, i32) {
    %c0_i32 = arith.constant 0 : i32
    %c0_i32_0 = arith.constant 0 : i32
    return %arg0, %c0_i32 : i32, i32
  }
  func.func @transform_1(%arg0: i32) -> (i32, i32) {
    %c0_i32 = arith.constant 0 : i32
    %c0_i32_0 = arith.constant 0 : i32
    return %arg0, %c0_i32 : i32, i32
  }
  func.func @transform_2(%arg0: i32) -> (i32, i32) {
    %c0_i32 = arith.constant 0 : i32
    %c0_i32_0 = arith.constant 0 : i32
    return %arg0, %c0_i32 : i32, i32
  }
}

</mosaic_0001>

<llo_original>
// kernel: tpu_custom_call.1
$region0: #{tpu_custom_call.1}
  #allocation0 [shape = 'u32[]', space=smem, size = 0x4, offset = 0x4, fixed_abs, tag = 'smem constant byte address 0x4 - core index']
  #allocation1 [shape = 'u32[144,128]{1,0:T(1,128)}', space=vmem, size = 0x12000, scoped, tag = 'internal scratch']
  %s0 = inlined_call_operand.hbm [shape: f32[16,128], index: 0, kind: input, shape index: {}]
  %s1 = inlined_call_operand.hbm [shape: f32[16,128], index: 1, kind: input, shape index: {}]
  %s2 = inlined_call_operand.hbm [shape: f32[1,1], index: 2, kind: output, shape index: {}]
  %s3 = sld [smem:[#allocation0]]
  $region26: #{tpu_custom_call.1} parent=0
    _
  %s5 = ssub.s32 1, %s3
  %s6 = scalar_select 0, %s5, %s3
  $region1: #{tpu_custom_call.1} parent=0
    #allocation2 [shape = 'u8[8192]{0}', space=vmem, size = 0x2000, scoped, tag = 'input window, operand 0, single buffered']
    #allocation3 [shape = 's32[1]{0}', space=sflag, size = 0x4, scoped, tag = 'scoped memory for tpu_custom_call.1']
    #allocation4 [shape = 's32[1]{0}', space=sflag, size = 0x4, scoped, tag = 'scoped memory for tpu_custom_call.1']
    #allocation5 [shape = 'u8[8192]{0}', space=vmem, size = 0x2000, scoped, tag = 'input window, operand 1, single buffered']
    #allocation6 [shape = 's32[1]{0}', space=sflag, size = 0x4, scoped, tag = 'scoped memory for tpu_custom_call.1']
    #allocation7 [shape = 'u8[512]{0}', space=smem, size = 0x200, scoped, tag = 'output window, operand 0, single buffered']
    %7 = vsyncpa [#allocation3], 0
    %8 = vsyncpa [#allocation6], 0
    %9 = vsyncpa [#allocation4], 0
    // Predicated region
    $region2: #{tpu_custom_call.1} parent=1 // pred_check
      _
    $region3: #{tpu_custom_call.1} parent=1 // pred_check_branch
      %11 = sbr.rel (0) target = $region5
    $region4: #{tpu_custom_call.1} parent=1 // pred_region
      %s13 = ssub.s32 256, 256
      %14 = vsyncadd [#allocation3], %s13
      %s15 = sshll.u32 [#allocation2], 4
      %s16 = int_to_ptr.vmem [resolvable:$true] %s15
      %21 = dma.hbm_to_vmem [thread:$0]  %s0, 256, %s16, [#allocation3], 128, 128, 8
    $region5: #{tpu_custom_call.1} parent=1 // pred_fallthru
      _
    // Predicated region
    $region6: #{tpu_custom_call.1} parent=1 // pred_check
      _
    $region7: #{tpu_custom_call.1} parent=1 // pred_check_branch
      %23 = sbr.rel (0) target = $region9
    $region8: #{tpu_custom_call.1} parent=1 // pred_region
      %s25 = ssub.s32 256, 256
      %26 = vsyncadd [#allocation6], %s25
      %s27 = sshll.u32 [#allocation5], 4
      %s28 = int_to_ptr.vmem [resolvable:$true] %s27
      %33 = dma.hbm_to_vmem [thread:$0]  %s1, 256, %s28, [#allocation6], 128, 128, 8
    $region9: #{tpu_custom_call.1} parent=1 // pred_fallthru
      _
    // Predicated region
    $region10: #{tpu_custom_call.1} parent=1 // pred_check
      _
    $region11: #{tpu_custom_call.1} parent=1 // pred_check_branch
      %35 = sbr.rel (0) target = $region13
    $region12: #{tpu_custom_call.1} parent=1 // pred_region
      %36 = dma.done [#allocation3], 256
    $region13: #{tpu_custom_call.1} parent=1 // pred_fallthru
      _
    // Predicated region
    $region14: #{tpu_custom_call.1} parent=1 // pred_check
      _
    $region15: #{tpu_custom_call.1} parent=1 // pred_check_branch
      %38 = sbr.rel (0) target = $region17
    $region16: #{tpu_custom_call.1} parent=1 // pred_region
      %39 = dma.done [#allocation6], 256
    $region17: #{tpu_custom_call.1} parent=1 // pred_fallthru
      _
    %v40 = vld [vmem:[#allocation2] sm:$0xff]
    %v41 = vld [vmem:[#allocation2 + $0x8] sm:$0xff]
    %v42 = vld [vmem:[#allocation5] sm:$0xff]
    %v43 = vld [vmem:[#allocation5 + $0x8] sm:$0xff]
    %44 = vmax.xlane.f32.xlu0 %v40
    %v45 = vpop.xlane.xlu0 %44
    %46 = vmax.xlane.f32.xlu0 %v41
    %v47 = vpop.xlane.xlu0 %46
    %v48 = vsub.f32 %v40, %v45
    %v49 = vsub.f32 %v41, %v47
    %v50 = vmul.f32 %v48, 1.442695
    %v51 = vpow.pop %v50
    %v52 = vmul.f32 %v49, 1.442695
    %v53 = vpow.pop %v52
    %54 = vadd.xlane.f32.xlu0 %v51
    %v55 = vpop.xlane.xlu0 %54
    %56 = vadd.xlane.f32.xlu0 %v53
    %v57 = vpop.xlane.xlu0 %56
    %v58 = vlog2.pop %v55
    %v59 = vmul.f32 %v58, 0.6931472
    %v60 = vlog2.pop %v57
    %v61 = vmul.f32 %v60, 0.6931472
    %62 = vadd.xlane.f32.xlu0 %v42
    %v63 = vpop.xlane.xlu0 %62
    %64 = vadd.xlane.f32.xlu0 %v43
    %v65 = vpop.xlane.xlu0 %64
    %v66 = vmul.f32 %v42, %v40
    %v67 = vmul.f32 %v43, %v41
    %68 = vadd.xlane.f32.xlu0 %v66
    %v69 = vpop.xlane.xlu0 %68
    %70 = vadd.xlane.f32.xlu0 %v67
    %v71 = vpop.xlane.xlu0 %70
    %v72 = vadd.f32 %v45, %v59
    %v73 = vadd.f32 %v47, %v61
    %v74 = vmul.f32 %v72, %v63
    %v75 = vmul.f32 %v73, %v65
    %v76 = vsub.f32 %v74, %v69
    %v77 = vsub.f32 %v75, %v71
    %v78 = vlaneseq
    %v79 = vshrl.u32 %v78, 7
    %v80 = vadd.s32 %v79, 8
    %s81 = smul.u32 0, 16
    %v82 = vstv %s81
    %v83 = vadd.s32 %v79, %v82
    %v84 = vadd.s32 %v80, %v82
    %vm85 = vcmp.lt.s32.totalorder %v83, 16
    %vm86 = vcmp.lt.s32.totalorder %v84, 16
    %v87 = vsel %vm85, %v76, 0.0
    %v88 = vsel %vm86, %v77, 0.0
    %vm89 = vcmask 7168
    %v90 = vsel %vm89, %v87, 0.0
    %v91 = vsel %vm89, %v88, 0.0
    %v92 = vadd.f32 %v90, %v91
    %93 = vadd.xlane.f32.xlu0 %v92
    %v94 = vpop.xlane.xlu0 %93
    %v95 = vrot.slane %v94, 4
    %v96 = vadd.f32 %v94, %v95
    %v97 = vrot.slane %v96, 2
    %v98 = vadd.f32 %v96, %v97
    %v99 = vrot.slane %v98, 1
    %v100 = vadd.f32 %v98, %v99
    %s101 = vtos %v100
    %s102 = scalar_lea.smem [#allocation7], 0
    %103 = sst [smem:[%s102]] %s101
    // Predicated region
    $region18: #{tpu_custom_call.1} parent=1 // pred_check
      _
    $region19: #{tpu_custom_call.1} parent=1 // pred_check_branch
      %105 = sbr.rel (0) target = $region21
    $region20: #{tpu_custom_call.1} parent=1 // pred_region
      %s107 = ssub.s32 16, 16
      %108 = vsyncadd [#allocation4], %s107
      %111 = dma.smem_to_hbm [#allocation7], 16, %s2, [#allocation4]
    $region21: #{tpu_custom_call.1} parent=1 // pred_fallthru
      _
    // Predicated region
    $region22: #{tpu_custom_call.1} parent=1 // pred_check
      _
    $region23: #{tpu_custom_call.1} parent=1 // pred_check_branch
      %113 = sbr.rel (0) target = $region25
    $region24: #{tpu_custom_call.1} parent=1 // pred_region
      %114 = dma.done [#allocation4], 16
    $region25: #{tpu_custom_call.1} parent=1 // pred_fallthru
      _
    %115 = sfence
    %116 = vsyncpa [#allocation3], 1
    %117 = vsyncpa [#allocation6], 1
    %118 = vsyncpa [#allocation4], 1

</llo_original>
